<compile_context>
chip_gen: v5e
topology: v5e:2x2
jax: 0.10.0
libtpu: 0.0.40
codegen_flags: <defaults>
</compile_context>

<pallas_src>
import jax
import jax.numpy as jnp
from jax.experimental import pallas as pl
from jax.experimental.pallas import tpu as pltpu

LANE = 128            # lane width: last dim of every kernel block is a multiple of this
MAX_TIME_BLOCK = 8    # steps fused per grid iteration (modest unroll -> no vreg spill)


def _round_up(n, m):
    return ((n + m - 1) // m) * m


def _time_block(t, max_tt=MAX_TIME_BLOCK):
    """Largest divisor of t that is <= max_tt (falls back to 1)."""
    for tt in range(min(t, max_tt), 0, -1):
        if t % tt == 0:
            return tt
    return 1


def _resident(shape):
    """BlockSpec for an array that is the same single block at every grid step
    (stays VMEM-resident across the whole grid)."""
    nd = len(shape)
    return pl.BlockSpec(shape, lambda *_: (0,) * nd)


# ----------------------------------------------------------------------------
# One-time parameter fusion (NOT in the per-step / per-sequence hot path).
# ----------------------------------------------------------------------------
def fuse_params(params, n_h, compute_dtype=jnp.float32):
    Wz, Wr, Wh = params["Wz"], params["Wr"], params["Wh"]
    cd = compute_dtype
    return {
        "Wx":   jnp.concatenate([Wz[:, n_h:], Wr[:, n_h:], Wh[:, n_h:]], 0).astype(cd),  # (3n_h, n_x)
        "Whzr": jnp.concatenate([Wz[:, :n_h], Wr[:, :n_h]], 0).astype(cd),               # (2n_h, n_h)
        "Whh":  Wh[:, :n_h].astype(cd),                                                  # (n_h, n_h)
        "bzrh": jnp.concatenate([params["bz"], params["br"], params["bh"]], 0).astype(jnp.float32),
        "Wy":   params["Wy"].astype(cd),
        "by":   params["by"].astype(jnp.float32),
    }


# ----------------------------------------------------------------------------
# Shared GRU recurrence (gx = Wx@x + b already computed, f32).
# ----------------------------------------------------------------------------
def _gru_recurrence(gx, h, whzr, whh, n_h):
    wdt = whzr.dtype                               # MXU operand dtype (f32 or bf16)
    gh = jnp.dot(whzr, h.astype(wdt), preferred_element_type=jnp.float32)
    z = jax.nn.sigmoid(gx[:n_h] + gh[:n_h])
    r = jax.nn.sigmoid(gx[n_h:2 * n_h] + gh[n_h:])
    h_cand = jnp.tanh(gx[2 * n_h:] +
                      jnp.dot(whh, (r * h).astype(wdt),
                              preferred_element_type=jnp.float32))
    # h_next = z*h + (1-z)*h_cand, rewritten with one fewer VPU op.
    return h_cand + z * (h - h_cand)


# ----------------------------------------------------------------------------
# Single-step kernel (exactly SimpleGRU.forward).
# ----------------------------------------------------------------------------
def gru_step_kernel(x_ref, h_ref, wx_ref, whzr_ref, whh_ref, bzrh_ref,
                    wy_ref, by_ref, h_next_ref, y_ref):
    n_h = h_ref.shape[0]
    gx = (jnp.dot(wx_ref[...], x_ref[...].astype(wx_ref.dtype),
                  preferred_element_type=jnp.float32) + bzrh_ref[...])
    h_next = _gru_recurrence(gx, h_ref[...], whzr_ref[...], whh_ref[...], n_h)
    h_next_ref[...] = h_next
    y_ref[...] = (jnp.dot(wy_ref[...], h_next.astype(wy_ref.dtype),
                          preferred_element_type=jnp.float32) + by_ref[...])


@jax.jit
def simple_gru_forward(x_t, h_prev, fused):
    """One GRU step (mirrors SimpleGRU.forward).  For step-by-step loops,
    prefer simple_gru_sequence: the per-call pad/slice here are XLA copies
    and are only acceptable because this path runs once in the demo."""
    n_x, B = x_t.shape
    n_h = h_prev.shape[0]
    n_y = fused["Wy"].shape[0]

    Bp = _round_up(max(B, LANE), LANE)             # lane-dense batch padding
    if Bp != B:
        x_t = jnp.pad(x_t, ((0, 0), (0, Bp - B)))
        h_prev = jnp.pad(h_prev, ((0, 0), (0, Bp - B)))

    ins = (x_t, h_prev, fused["Wx"], fused["Whzr"], fused["Whh"],
           fused["bzrh"], fused["Wy"], fused["by"])
    h_next, y_pred = pl.pallas_call(
        gru_step_kernel,
        out_shape=(jax.ShapeDtypeStruct((n_h, Bp), jnp.float32),
                   jax.ShapeDtypeStruct((n_y, Bp), jnp.float32)),
        in_specs=[_resident(a.shape) for a in ins],
        out_specs=(_resident((n_h, Bp)), _resident((n_y, Bp))),
    )(*ins)
    return h_next[:, :B], y_pred[:, :B]


# ----------------------------------------------------------------------------
# Sequence kernel: grid = (batch_shards, time_blocks).
# ----------------------------------------------------------------------------
def gru_seq_kernel(x_ref, h0_ref, wx_ref, whzr_ref, whh_ref, bzrh_ref,
                   wy_ref, by_ref, h_last_ref, y_ref,
                   h_scr, gx_scr, hall_scr):
    n_h = h_scr.shape[0]
    bs = h_scr.shape[1]                 # 128-lane batch shard width
    tt = gx_scr.shape[1] // bs          # time steps fused in this block
    t_blk = pl.program_id(1)

    # New batch shard -> (re)load the initial hidden state into the carry.
    @pl.when(t_blk == 0)
    def _():
        h_scr[...] = h0_ref[0]

    # Hoisted x-side gate matmul for the WHOLE time block (off the serial
    # chain): (3n_h, n_x) @ (n_x, tt*128) instead of tt sliver matmuls.
    gx_scr[...] = (jnp.dot(wx_ref[...], x_ref[0],
                           preferred_element_type=jnp.float32) + bzrh_ref[...])

    whzr = whzr_ref[...]
    whh = whh_ref[...]
    h = h_scr[...]
    # Statically unrolled serial recurrence; tt <= 8 keeps vreg pressure low
    # and each step's h is flushed to the VMEM scratch.
    for s in range(tt):
        h = _gru_recurrence(gx_scr[:, s * bs:(s + 1) * bs], h, whzr, whh, n_h)
        hall_scr[:, s * bs:(s + 1) * bs] = h
    h_scr[...] = h
    h_last_ref[0] = h

    # Batched output projection: one (n_y, n_h) @ (n_h, tt*128) matmul per
    # time block instead of one per step.
    y_ref[0] = (jnp.dot(wy_ref[...], hall_scr[...].astype(wy_ref.dtype),
                        preferred_element_type=jnp.float32) + by_ref[...])


@jax.jit
def simple_gru_sequence(xs, h0, fused):
    """Run T GRU steps.  xs: (T, n_x, B), h0: (n_h, B) ->
    (h_last (n_h, B), ys (T, n_y, B))."""
    T, n_x, B = xs.shape
    n_h = h0.shape[0]
    n_y = fused["Wy"].shape[0]
    wdt = fused["Wx"].dtype

    Bp = _round_up(max(B, LANE), LANE)
    nB = Bp // LANE                      # 128-lane batch shards ("parallel" axis)
    Tt = _time_block(T)                  # steps per grid iteration
    nT = T // Tt

    xs_p = jnp.pad(xs, ((0, 0), (0, 0), (0, Bp - B))) if Bp != B else xs
    h0_p = jnp.pad(h0, ((0, 0), (0, Bp - B))) if Bp != B else h0

    # Wrapper-side layout plumbing (one-off XLA copies, outside the kernel):
    #   x2[b, :, t*128:(t+1)*128] = xs[t, :, b*128:(b+1)*128]
    # so every kernel block is a lane-dense (n_x, Tt*128) slab and the fused
    # x-side gate matmul runs with N = Tt*128 instead of per-step slivers.
    # (For tiny B one could pack T*B onto lanes instead of padding B to 128;
    # kept simple here since production per-shard batch should be a lane
    # multiple anyway.)
    x2 = (xs_p.reshape(T, n_x, nB, LANE).transpose(2, 1, 0, 3)
               .reshape(nB, n_x, T * LANE).astype(wdt))
    h0_2 = h0_p.reshape(n_h, nB, LANE).transpose(1, 0, 2)        # (nB, n_h, 128)

    in_specs = [
        pl.BlockSpec((1, n_x, Tt * LANE), lambda b, t: (b, 0, t)),   # x streamed
        pl.BlockSpec((1, n_h, LANE),      lambda b, t: (b, 0, 0)),   # h0 shard
        _resident(fused["Wx"].shape),                                # weights stay
        _resident(fused["Whzr"].shape),                              # VMEM-resident
        _resident(fused["Whh"].shape),
        _resident(fused["bzrh"].shape),
        _resident(fused["Wy"].shape),
        _resident(fused["by"].shape),
    ]
    out_specs = (
        pl.BlockSpec((1, n_h, LANE),      lambda b, t: (b, 0, 0)),   # h_last
        pl.BlockSpec((1, n_y, Tt * LANE), lambda b, t: (b, 0, t)),   # y streamed
    )

    h_last2, y2 = pl.pallas_call(
        gru_seq_kernel,
        grid=(nB, nT),
        out_shape=(jax.ShapeDtypeStruct((nB, n_h, LANE), jnp.float32),
                   jax.ShapeDtypeStruct((nB, n_y, T * LANE), jnp.float32)),
        in_specs=in_specs,
        out_specs=out_specs,
        scratch_shapes=[
            pltpu.VMEM((n_h, LANE), jnp.float32),            # carried hidden state
            pltpu.VMEM((3 * n_h, Tt * LANE), jnp.float32),   # Gx for the time block
            pltpu.VMEM((n_h, Tt * LANE), jnp.float32),       # H block for batched Wy
        ],
        compiler_params=pltpu.CompilerParams(
            dimension_semantics=("parallel", "arbitrary")),
    )(x2, h0_2, fused["Wx"], fused["Whzr"], fused["Whh"],
      fused["bzrh"], fused["Wy"], fused["by"])

    # Undo the layout plumbing and batch padding.
    h_last = h_last2.transpose(1, 0, 2).reshape(n_h, Bp)[:, :B]
    ys = (y2.reshape(nB, n_y, T, LANE).transpose(2, 1, 0, 3)
            .reshape(T, n_y, Bp)[:, :, :B])
    return h_last, ys


# ----------------------------------------------------------------------------
# Params + pure-JAX reference (mirrors the PyTorch forward; HIGHEST-precision
# matmuls so the check isolates kernel error from XLA's default TPU matmul
# precision).
# ----------------------------------------------------------------------------
def init_params(key, n_x, n_h, n_y):
    k1, k2, k3, k4 = jax.random.split(key, 4)
    return {
        "Wz": 0.01 * jax.random.normal(k1, (n_h, n_x + n_h), jnp.float32),
        "bz": jnp.zeros((n_h, 1), jnp.float32),
        "Wr": 0.01 * jax.random.normal(k2, (n_h, n_x + n_h), jnp.float32),
        "br": jnp.zeros((n_h, 1), jnp.float32),
        "Wh": 0.01 * jax.random.normal(k3, (n_h, n_x + n_h), jnp.float32),
        "bh": jnp.zeros((n_h, 1), jnp.float32),
        "Wy": 0.01 * jax.random.normal(k4, (n_y, n_h), jnp.float32),
        "by": jnp.zeros((n_y, 1), jnp.float32),
    }


def reference_forward(x_t, h_prev, params):
    hp = jax.lax.Precision.HIGHEST
    concat = jnp.concatenate([h_prev, x_t], axis=0)
    z_t = jax.nn.sigmoid(jnp.matmul(params["Wz"], concat, precision=hp) + params["bz"])
    r_t = jax.nn.sigmoid(jnp.matmul(params["Wr"], concat, precision=hp) + params["br"])
    concat_r = jnp.concatenate([r_t * h_prev, x_t], axis=0)
    h_cand = jnp.tanh(jnp.matmul(params["Wh"], concat_r, precision=hp) + params["bh"])
    h_next = z_t * h_prev + (1.0 - z_t) * h_cand
    y_pred = jnp.matmul(params["Wy"], h_next, precision=hp) + params["by"]
    return h_next, y_pred


if __name__ == "__main__":
    n_x, n_h, n_y, batch, T = 16, 32, 24, 8, 16

    key = jax.random.PRNGKey(0)
    kp, kx, kh, ks = jax.random.split(key, 4)
    params = init_params(kp, n_x, n_h, n_y)

    x_t = jax.random.normal(kx, (n_x, batch), jnp.float32)
    h_prev = jax.random.normal(kh, (n_h, batch), jnp.float32)
    xs = jax.random.normal(ks, (T, n_x, batch), jnp.float32)

    # f32 references.
    h_ref1, y_ref1 = reference_forward(x_t, h_prev, params)
    h_r = h_prev
    ys_r = []
    for t in range(T):
        h_r, y_r = reference_forward(xs[t], h_r, params)
        ys_r.append(y_r)
    ys_r = jnp.stack(ys_r, axis=0)

    # Tolerance covers the kernel's MXU multi-pass f32 matmuls vs the f32
    # reference and the algebraic h_next rewrite; genuine bugs are O(1).
    TOL = dict(atol=1e-3, rtol=1e-3)

    # --- single step, f32 weights (matches SimpleGRU.forward) ---
    fused32 = fuse_params(params, n_h)
    h_next, y_pred = simple_gru_forward(x_t, h_prev, fused32)
    jax.block_until_ready((h_next, y_pred))
    assert h_next.shape == (n_h, batch) and y_pred.shape == (n_y, batch)
    assert jnp.allclose(h_next, h_ref1, **TOL)
    assert jnp.allclose(y_pred, y_ref1, **TOL)

    # --- T steps in one time-blocked kernel, weights VMEM-resident, f32 ---
    h_last, ys = simple_gru_sequence(xs, h_prev, fused32)
    jax.block_until_ready((h_last, ys))
    assert h_last.shape == (n_h, batch) and ys.shape == (T, n_y, batch)
    assert jnp.allclose(h_last, h_r, **TOL)
    assert jnp.allclose(ys, ys_r, **TOL)

    # --- same sequence with bf16 MXU operands (gate math stays f32) ---
    fused16 = fuse_params(params, n_h, compute_dtype=jnp.bfloat16)
    h_last16, ys16 = simple_gru_sequence(xs, h_prev, fused16)
    jax.block_until_ready((h_last16, ys16))
    assert jnp.allclose(h_last16, h_r, atol=3e-2, rtol=3e-2)
    assert jnp.allclose(ys16, ys_r, atol=3e-2, rtol=3e-2)

    print("KERNEL_OK")
</pallas_src>

<mosaic_0001>
module attributes {stable_mosaic.version = 11 : i64} {
  func.func @gru_step_kernel(%arg0: memref<16x128xf32, #tpu.memory_space<vmem>>, %arg1: memref<32x128xf32, #tpu.memory_space<vmem>>, %arg2: memref<96x16xf32, #tpu.memory_space<vmem>>, %arg3: memref<64x32xf32, #tpu.memory_space<vmem>>, %arg4: memref<32x32xf32, #tpu.memory_space<vmem>>, %arg5: memref<96x1xf32, #tpu.memory_space<vmem>>, %arg6: memref<24x32xf32, #tpu.memory_space<vmem>>, %arg7: memref<24x1xf32, #tpu.memory_space<vmem>>, %arg8: memref<32x128xf32, #tpu.memory_space<vmem>>, %arg9: memref<24x128xf32, #tpu.memory_space<vmem>>) attributes {dimension_semantics = [], scalar_prefetch = 0 : i64, scratch_operands = 0 : i64, tpu.core_type = #tpu.core_type<tc>} {
    %c0 = arith.constant 0 : index
    %c0_0 = arith.constant 0 : index
    %0 = vector.load %arg2[%c0, %c0_0] : memref<96x16xf32, #tpu.memory_space<vmem>>, vector<96x16xf32>
    %c0_1 = arith.constant 0 : index
    %c0_2 = arith.constant 0 : index
    %1 = vector.load %arg0[%c0_1, %c0_2] : memref<16x128xf32, #tpu.memory_space<vmem>>, vector<16x128xf32>
    %cst = arith.constant dense<0.000000e+00> : vector<96x128xf32>
    %2 = tpu.matmul %0, %1, %cst {dimension_numbers = #tpu.dot_dimension_numbers<[1], [0], [0], [1], [0, 0, 1, 1], [], []>} : vector<96x16xf32>, vector<16x128xf32>, vector<96x128xf32> -> vector<96x128xf32>
    %c0_3 = arith.constant 0 : index
    %c0_4 = arith.constant 0 : index
    %3 = vector.load %arg5[%c0_3, %c0_4] : memref<96x1xf32, #tpu.memory_space<vmem>>, vector<96x1xf32>
    %4 = vector.broadcast %3 : vector<96x1xf32> to vector<96x128xf32>
    %5 = arith.addf %2, %4 : vector<96x128xf32>
    %c0_5 = arith.constant 0 : index
    %c0_6 = arith.constant 0 : index
    %6 = vector.load %arg1[%c0_5, %c0_6] : memref<32x128xf32, #tpu.memory_space<vmem>>, vector<32x128xf32>
    %c0_7 = arith.constant 0 : index
    %c0_8 = arith.constant 0 : index
    %7 = vector.load %arg3[%c0_7, %c0_8] : memref<64x32xf32, #tpu.memory_space<vmem>>, vector<64x32xf32>
    %c0_9 = arith.constant 0 : index
    %c0_10 = arith.constant 0 : index
    %8 = vector.load %arg4[%c0_9, %c0_10] : memref<32x32xf32, #tpu.memory_space<vmem>>, vector<32x32xf32>
    %cst_11 = arith.constant dense<0.000000e+00> : vector<64x128xf32>
    %9 = tpu.matmul %7, %6, %cst_11 {dimension_numbers = #tpu.dot_dimension_numbers<[1], [0], [0], [1], [0, 0, 1, 1], [], []>} : vector<64x32xf32>, vector<32x128xf32>, vector<64x128xf32> -> vector<64x128xf32>
    %10 = vector.extract_strided_slice %5 {offsets = [0, 0], sizes = [32, 128], strides = [1, 1]} : vector<96x128xf32> to vector<32x128xf32>
    %11 = vector.extract_strided_slice %9 {offsets = [0, 0], sizes = [32, 128], strides = [1, 1]} : vector<64x128xf32> to vector<32x128xf32>
    %12 = arith.addf %10, %11 : vector<32x128xf32>
    %13 = arith.negf %12 : vector<32x128xf32>
    %14 = math.exp %13 : vector<32x128xf32>
    %cst_12 = arith.constant 1.000000e+00 : f32
    %15 = vector.broadcast %cst_12 : f32 to vector<32x128xf32>
    %16 = arith.addf %15, %14 : vector<32x128xf32>
    %17 = arith.divf %15, %16 : vector<32x128xf32>
    %18 = vector.extract_strided_slice %5 {offsets = [32, 0], sizes = [32, 128], strides = [1, 1]} : vector<96x128xf32> to vector<32x128xf32>
    %19 = vector.extract_strided_slice %9 {offsets = [32, 0], sizes = [32, 128], strides = [1, 1]} : vector<64x128xf32> to vector<32x128xf32>
    %20 = arith.addf %18, %19 : vector<32x128xf32>
    %21 = arith.negf %20 : vector<32x128xf32>
    %22 = math.exp %21 : vector<32x128xf32>
    %cst_13 = arith.constant 1.000000e+00 : f32
    %23 = vector.broadcast %cst_13 : f32 to vector<32x128xf32>
    %24 = arith.addf %23, %22 : vector<32x128xf32>
    %25 = arith.divf %23, %24 : vector<32x128xf32>
    %26 = vector.extract_strided_slice %5 {offsets = [64, 0], sizes = [32, 128], strides = [1, 1]} : vector<96x128xf32> to vector<32x128xf32>
    %27 = arith.mulf %25, %6 : vector<32x128xf32>
    %cst_14 = arith.constant dense<0.000000e+00> : vector<32x128xf32>
    %28 = tpu.matmul %8, %27, %cst_14 {dimension_numbers = #tpu.dot_dimension_numbers<[1], [0], [0], [1], [0, 0, 1, 1], [], []>} : vector<32x32xf32>, vector<32x128xf32>, vector<32x128xf32> -> vector<32x128xf32>
    %29 = arith.addf %26, %28 : vector<32x128xf32>
    %30 = math.tanh %29 : vector<32x128xf32>
    %31 = arith.subf %6, %30 : vector<32x128xf32>
    %32 = arith.mulf %17, %31 : vector<32x128xf32>
    %33 = arith.addf %30, %32 : vector<32x128xf32>
    %c0_15 = arith.constant 0 : index
    %c0_16 = arith.constant 0 : index
    %34 = vector.load %arg8[%c0_15, %c0_16] : memref<32x128xf32, #tpu.memory_space<vmem>>, vector<32x128xf32>
    tpu.vector_store %arg8[%c0_15, %c0_16], %33 {strides = array<i32>} : memref<32x128xf32, #tpu.memory_space<vmem>>, vector<32x128xf32>,
    %c0_17 = arith.constant 0 : index
    %c0_18 = arith.constant 0 : index
    %35 = vector.load %arg6[%c0_17, %c0_18] : memref<24x32xf32, #tpu.memory_space<vmem>>, vector<24x32xf32>
    %cst_19 = arith.constant dense<0.000000e+00> : vector<24x128xf32>
    %36 = tpu.matmul %35, %33, %cst_19 {dimension_numbers = #tpu.dot_dimension_numbers<[1], [0], [0], [1], [0, 0, 1, 1], [], []>} : vector<24x32xf32>, vector<32x128xf32>, vector<24x128xf32> -> vector<24x128xf32>
    %c0_20 = arith.constant 0 : index
    %c0_21 = arith.constant 0 : index
    %37 = vector.load %arg7[%c0_20, %c0_21] : memref<24x1xf32, #tpu.memory_space<vmem>>, vector<24x1xf32>
    %38 = vector.broadcast %37 : vector<24x1xf32> to vector<24x128xf32>
    %39 = arith.addf %36, %38 : vector<24x128xf32>
    %c0_22 = arith.constant 0 : index
    %c0_23 = arith.constant 0 : index
    %40 = vector.load %arg9[%c0_22, %c0_23] : memref<24x128xf32, #tpu.memory_space<vmem>>, vector<24x128xf32>
    tpu.vector_store %arg9[%c0_22, %c0_23], %39 {strides = array<i32>} : memref<24x128xf32, #tpu.memory_space<vmem>>, vector<24x128xf32>,
    return
  }
}

</mosaic_0001>

<llo_original>
// kernel: simple_gru_forward.1
$region0: #{simple_gru_forward.1}
  #allocation0 [shape = 'u32[]', space=smem, size = 0x4, offset = 0x4, fixed_abs, tag = 'smem constant byte address 0x4 - core index']
  #allocation1 [shape = 'u32[72,128]{1,0:T(1,128)}', space=vmem, size = 0x9000, scoped, tag = 'internal scratch']
  %s0 = inlined_call_operand.vmem [shape: f32[16,128], index: 0, kind: input, shape index: {}]
  %s1 = inlined_call_operand.vmem [shape: f32[32,128], index: 1, kind: input, shape index: {}]
  %s2 = inlined_call_operand.vmem [shape: f32[96,16], index: 2, kind: input, shape index: {}]
  %s3 = inlined_call_operand.vmem [shape: f32[64,32], index: 3, kind: input, shape index: {}]
  %s4 = inlined_call_operand.vmem [shape: f32[32,32], index: 4, kind: input, shape index: {}]
  %s5 = inlined_call_operand.vmem [shape: f32[96,1], index: 5, kind: input, shape index: {}]
  %s6 = inlined_call_operand.vmem [shape: f32[24,32], index: 6, kind: input, shape index: {}]
  %s7 = inlined_call_operand.vmem [shape: f32[24,1], index: 7, kind: input, shape index: {}]
  %s8 = inlined_call_operand.vmem [shape: f32[32,128], index: 8, kind: output, shape index: {0}]
  %s9 = inlined_call_operand.vmem [shape: f32[24,128], index: 9, kind: output, shape index: {1}]
  %10 = xla_tuple %s8, %s9
  %s11 = sld [smem:[#allocation0]]
  $region50: #{simple_gru_forward.1} parent=0
    _
  %s13 = ssub.s32 1, %s11
  %s14 = scalar_select 0, %s13, %s11
  // Predicated region
  $region2: #{simple_gru_forward.1} parent=0 // pred_check
    _
  $region3: #{simple_gru_forward.1} parent=0 // pred_check_branch
    %16 = sbr.rel (0) target = $region5
  $region4: #{simple_gru_forward.1} parent=0 // pred_region
    _
  $region5: #{simple_gru_forward.1} parent=0 // pred_fallthru
    _
  // Predicated region
  $region6: #{simple_gru_forward.1} parent=0 // pred_check
    _
  $region7: #{simple_gru_forward.1} parent=0 // pred_check_branch
    %18 = sbr.rel (0) target = $region9
  $region8: #{simple_gru_forward.1} parent=0 // pred_region
    _
  $region9: #{simple_gru_forward.1} parent=0 // pred_fallthru
    _
  // Predicated region
  $region10: #{simple_gru_forward.1} parent=0 // pred_check
    _
  $region11: #{simple_gru_forward.1} parent=0 // pred_check_branch
    %20 = sbr.rel (0) target = $region13
  $region12: #{simple_gru_forward.1} parent=0 // pred_region
    _
  $region13: #{simple_gru_forward.1} parent=0 // pred_fallthru
    _
  // Predicated region
  $region14: #{simple_gru_forward.1} parent=0 // pred_check
    _
  $region15: #{simple_gru_forward.1} parent=0 // pred_check_branch
    %22 = sbr.rel (0) target = $region17
  $region16: #{simple_gru_forward.1} parent=0 // pred_region
    _
  $region17: #{simple_gru_forward.1} parent=0 // pred_fallthru
    _
  // Predicated region
  $region18: #{simple_gru_forward.1} parent=0 // pred_check
    _
  $region19: #{simple_gru_forward.1} parent=0 // pred_check_branch
    %24 = sbr.rel (0) target = $region21
  $region20: #{simple_gru_forward.1} parent=0 // pred_region
    _
  $region21: #{simple_gru_forward.1} parent=0 // pred_fallthru
    _
  // Predicated region
  $region22: #{simple_gru_forward.1} parent=0 // pred_check
    _
  $region23: #{simple_gru_forward.1} parent=0 // pred_check_branch
    %26 = sbr.rel (0) target = $region25
  $region24: #{simple_gru_forward.1} parent=0 // pred_region
    _
  $region25: #{simple_gru_forward.1} parent=0 // pred_fallthru
    _
  // Predicated region
  $region26: #{simple_gru_forward.1} parent=0 // pred_check
    _
  $region27: #{simple_gru_forward.1} parent=0 // pred_check_branch
    %28 = sbr.rel (0) target = $region29
  $region28: #{simple_gru_forward.1} parent=0 // pred_region
    _
  $region29: #{simple_gru_forward.1} parent=0 // pred_fallthru
    _
  // Predicated region
  $region30: #{simple_gru_forward.1} parent=0 // pred_check
    _
  $region31: #{simple_gru_forward.1} parent=0 // pred_check_branch
    %30 = sbr.rel (0) target = $region33
  $region32: #{simple_gru_forward.1} parent=0 // pred_region
    _
  $region33: #{simple_gru_forward.1} parent=0 // pred_fallthru
    _
  %v31 = vld [vmem:[%s2] sm:$0xff]
  %v32 = vld [vmem:[%s2 + $0x8] sm:$0xff]
  %v33 = vld [vmem:[%s2 + $0x10] sm:$0xff]
  %v34 = vld [vmem:[%s2 + $0x18] sm:$0xff]
  %v35 = vld [vmem:[%s2 + $0x20] sm:$0xff]
  %v36 = vld [vmem:[%s2 + $0x28] sm:$0xff]
  %v37 = vld [vmem:[%s2 + $0x30] sm:$0xff]
  %v38 = vld [vmem:[%s2 + $0x38] sm:$0xff]
  %v39 = vld [vmem:[%s2 + $0x40] sm:$0xff]
  %v40 = vld [vmem:[%s2 + $0x48] sm:$0xff]
  %v41 = vld [vmem:[%s2 + $0x50] sm:$0xff]
  %v42 = vld [vmem:[%s2 + $0x58] sm:$0xff]
  %v43 = vld [vmem:[%s0] sm:$0xff]
  %v44 = vld [vmem:[%s0 + $0x8] sm:$0xff]
  %v45 = vld [vmem:[%s5] sm:$0xff]
  %v46 = vld [vmem:[%s5 + $0x8] sm:$0xff]
  %v47 = vld [vmem:[%s5 + $0x10] sm:$0xff]
  %v48 = vld [vmem:[%s5 + $0x18] sm:$0xff]
  %v49 = vld [vmem:[%s5 + $0x20] sm:$0xff]
  %v50 = vld [vmem:[%s5 + $0x28] sm:$0xff]
  %v51 = vld [vmem:[%s5 + $0x30] sm:$0xff]
  %v52 = vld [vmem:[%s5 + $0x38] sm:$0xff]
  %v53 = vld [vmem:[%s5 + $0x40] sm:$0xff]
  %v54 = vld [vmem:[%s5 + $0x48] sm:$0xff]
  %v55 = vld [vmem:[%s5 + $0x50] sm:$0xff]
  %v56 = vld [vmem:[%s5 + $0x58] sm:$0xff]
  %58 = vset.pattern.permute.xlu0 0
  %59 = vperm.xlu0 %58, %v45
  %v60 = vpop.permute.xlu0 %59
  %63 = vset.pattern.permute.xlu0 0
  %64 = vperm.xlu0 %63, %v46
  %v65 = vpop.permute.xlu0 %64
  %68 = vset.pattern.permute.xlu0 0
  %69 = vperm.xlu0 %68, %v47
  %v70 = vpop.permute.xlu0 %69
  %73 = vset.pattern.permute.xlu0 0
  %74 = vperm.xlu0 %73, %v48
  %v75 = vpop.permute.xlu0 %74
  %78 = vset.pattern.permute.xlu0 0
  %79 = vperm.xlu0 %78, %v49
  %v80 = vpop.permute.xlu0 %79
  %83 = vset.pattern.permute.xlu0 0
  %84 = vperm.xlu0 %83, %v50
  %v85 = vpop.permute.xlu0 %84
  %88 = vset.pattern.permute.xlu0 0
  %89 = vperm.xlu0 %88, %v51
  %v90 = vpop.permute.xlu0 %89
  %93 = vset.pattern.permute.xlu0 0
  %94 = vperm.xlu0 %93, %v52
  %v95 = vpop.permute.xlu0 %94
  %98 = vset.pattern.permute.xlu0 0
  %99 = vperm.xlu0 %98, %v53
  %v100 = vpop.permute.xlu0 %99
  %103 = vset.pattern.permute.xlu0 0
  %104 = vperm.xlu0 %103, %v54
  %v105 = vpop.permute.xlu0 %104
  %108 = vset.pattern.permute.xlu0 0
  %109 = vperm.xlu0 %108, %v55
  %v110 = vpop.permute.xlu0 %109
  %113 = vset.pattern.permute.xlu0 0
  %114 = vperm.xlu0 %113, %v56
  %v115 = vpop.permute.xlu0 %114
  %vm117 = vcmask 130048
  %v119 = vsel %vm117, %v31, 0
  %v122 = vsel %vm117, %v32, 0
  %v125 = vsel %vm117, %v33, 0
  %v128 = vsel %vm117, %v34, 0
  %v131 = vsel %vm117, %v35, 0
  %v134 = vsel %vm117, %v36, 0
  %v137 = vsel %vm117, %v37, 0
  %v140 = vsel %vm117, %v38, 0
  %v143 = vsel %vm117, %v39, 0
  %v146 = vsel %vm117, %v40, 0
  %v149 = vsel %vm117, %v41, 0
  %v152 = vsel %vm117, %v42, 0
  %154 = vmatpush.msra.mxu0 0.0
  %155 = vmatpush.msra.mxu0 0.0
  %156 = vmatpush.msra.mxu0 0.0
  %157 = vmatpush.msra.mxu0 0.0
  %158 = vmatpush.msra.mxu0 0.0
  %159 = vmatpush.msra.mxu0 0.0
  %160 = vmatpush.msra.mxu0 0.0
  %161 = vmatpush.msra.mxu0 0.0
  %162 = vmatpush.msra.mxu0 0.0
  %163 = vmatpush.msra.mxu0 0.0
  %164 = vmatpush.msra.mxu0 0.0
  %165 = vmatpush.msra.mxu0 0.0
  %166 = vmatpush.msra.mxu0 0.0
  %167 = vmatpush.msra.mxu0 0.0
  %168 = vmatpush.msra.mxu0 %v44
  %169 = vmatpush.msra.mxu0 %v43
  %170 = vmatmul.f32.gmra.mxu0 %v119
  %v171 = vpop.f32.mrf.mxu0
  %v172 = vadd.f32 %v60, %v171
  %173 = vmatmul.f32.gmra.mxu0 %v122
  %v174 = vpop.f32.mrf.mxu0
  %v175 = vadd.f32 %v65, %v174
  %176 = vmatmul.f32.gmra.mxu0 %v125
  %v177 = vpop.f32.mrf.mxu0
  %v178 = vadd.f32 %v70, %v177
  %179 = vmatmul.f32.gmra.mxu0 %v128
  %v180 = vpop.f32.mrf.mxu0
  %v181 = vadd.f32 %v75, %v180
  %182 = vmatmul.f32.gmra.mxu0 %v131
  %v183 = vpop.f32.mrf.mxu0
  %v184 = vadd.f32 %v80, %v183
  %185 = vmatmul.f32.gmra.mxu0 %v134
  %v186 = vpop.f32.mrf.mxu0
  %v187 = vadd.f32 %v85, %v186
  %188 = vmatmul.f32.gmra.mxu0 %v137
  %v189 = vpop.f32.mrf.mxu0
  %v190 = vadd.f32 %v90, %v189
  %191 = vmatmul.f32.gmra.mxu0 %v140
  %v192 = vpop.f32.mrf.mxu0
  %v193 = vadd.f32 %v95, %v192
  %194 = vmatmul.f32.gmra.mxu0 %v143
  %v195 = vpop.f32.mrf.mxu0
  %v196 = vadd.f32 %v100, %v195
  %197 = vmatmul.f32.gmra.mxu0 %v146
  %v198 = vpop.f32.mrf.mxu0
  %v199 = vadd.f32 %v105, %v198
  %200 = vmatmul.f32.gmra.mxu0 %v149
  %v201 = vpop.f32.mrf.mxu0
  %v202 = vadd.f32 %v110, %v201
  %203 = vmatmul.f32.gmra.mxu0 %v152
  %v204 = vpop.f32.mrf.mxu0
  %v205 = vadd.f32 %v115, %v204
  %206 = vdwg.mxu0
  %v207 = vld [vmem:[%s1] sm:$0xff]
  %v208 = vld [vmem:[%s1 + $0x8] sm:$0xff]
  %v209 = vld [vmem:[%s1 + $0x10] sm:$0xff]
  %v210 = vld [vmem:[%s1 + $0x18] sm:$0xff]
  %v211 = vld [vmem:[%s3] sm:$0xff]
  %v212 = vld [vmem:[%s3 + $0x8] sm:$0xff]
  %v213 = vld [vmem:[%s3 + $0x10] sm:$0xff]
  %v214 = vld [vmem:[%s3 + $0x18] sm:$0xff]
  %v215 = vld [vmem:[%s3 + $0x20] sm:$0xff]
  %v216 = vld [vmem:[%s3 + $0x28] sm:$0xff]
  %v217 = vld [vmem:[%s3 + $0x30] sm:$0xff]
  %v218 = vld [vmem:[%s3 + $0x38] sm:$0xff]
  %v219 = vld [vmem:[%s4] sm:$0xff]
  %v220 = vld [vmem:[%s4 + $0x8] sm:$0xff]
  %v221 = vld [vmem:[%s4 + $0x10] sm:$0xff]
  %v222 = vld [vmem:[%s4 + $0x18] sm:$0xff]
  %vm223 = vcmask 261120
  %v225 = vsel %vm223, %v211, 0
  %v228 = vsel %vm223, %v212, 0
  %v231 = vsel %vm223, %v213, 0
  %v234 = vsel %vm223, %v214, 0
  %v237 = vsel %vm223, %v215, 0
  %v240 = vsel %vm223, %v216, 0
  %v243 = vsel %vm223, %v217, 0
  %v246 = vsel %vm223, %v218, 0
  %248 = vmatpush.msra.mxu0 0.0
  %249 = vmatpush.msra.mxu0 0.0
  %250 = vmatpush.msra.mxu0 0.0
  %251 = vmatpush.msra.mxu0 0.0
  %252 = vmatpush.msra.mxu0 0.0
  %253 = vmatpush.msra.mxu0 0.0
  %254 = vmatpush.msra.mxu0 0.0
  %255 = vmatpush.msra.mxu0 0.0
  %256 = vmatpush.msra.mxu0 0.0
  %257 = vmatpush.msra.mxu0 0.0
  %258 = vmatpush.msra.mxu0 0.0
  %259 = vmatpush.msra.mxu0 0.0
  %260 = vmatpush.msra.mxu0 %v210
  %261 = vmatpush.msra.mxu0 %v209
  %262 = vmatpush.msra.mxu0 %v208
  %263 = vmatpush.msra.mxu0 %v207
  %264 = vmatmul.f32.gmra.mxu0 %v225
  %v265 = vpop.f32.mrf.mxu0
  %v266 = vadd.f32 0.0, %v265
  %267 = vmatmul.f32.gmra.mxu0 %v228
  %v268 = vpop.f32.mrf.mxu0
  %v269 = vadd.f32 0.0, %v268
  %270 = vmatmul.f32.gmra.mxu0 %v231
  %v271 = vpop.f32.mrf.mxu0
  %v272 = vadd.f32 0.0, %v271
  %273 = vmatmul.f32.gmra.mxu0 %v234
  %v274 = vpop.f32.mrf.mxu0
  %v275 = vadd.f32 0.0, %v274
  %276 = vmatmul.f32.gmra.mxu0 %v237
  %v277 = vpop.f32.mrf.mxu0
  %v278 = vadd.f32 0.0, %v277
  %279 = vmatmul.f32.gmra.mxu0 %v240
  %v280 = vpop.f32.mrf.mxu0
  %v281 = vadd.f32 0.0, %v280
  %282 = vmatmul.f32.gmra.mxu0 %v243
  %v283 = vpop.f32.mrf.mxu0
  %v284 = vadd.f32 0.0, %v283
  %285 = vmatmul.f32.gmra.mxu0 %v246
  %v286 = vpop.f32.mrf.mxu0
  %v287 = vadd.f32 0.0, %v286
  %288 = vdwg.mxu0
  %v289 = vadd.f32 %v172, %v266
  %v290 = vadd.f32 %v175, %v269
  %v291 = vadd.f32 %v178, %v272
  %v292 = vadd.f32 %v181, %v275
  %v293 = vxor.u32 %v289, 2147483648
  %v294 = vxor.u32 %v290, 2147483648
  %v295 = vxor.u32 %v291, 2147483648
  %v296 = vxor.u32 %v292, 2147483648
  %v297 = vmul.f32 %v293, 1.442695
  %v298 = vpow.pop %v297
  %v299 = vmul.f32 %v294, 1.442695
  %v300 = vpow.pop %v299
  %v301 = vmul.f32 %v295, 1.442695
  %v302 = vpow.pop %v301
  %v303 = vmul.f32 %v296, 1.442695
  %v304 = vpow.pop %v303
  %v305 = vadd.f32 %v298, 1.0
  %v306 = vadd.f32 %v300, 1.0
  %v307 = vadd.f32 %v302, 1.0
  %v308 = vadd.f32 %v304, 1.0
  %v309 = vrcp.pop %v305
  %v310 = vmul.f32 %v305, %v309
  %v311 = vsub.f32 1.0, %v310
  %v312 = vmul.f32 %v309, %v311
  %v313 = vadd.f32 %v309, %v312
  %vm314 = vweird.f32 %v305
  %vm315 = vweird.f32 %v309
  %vm316 = vmor %vm314, %vm315
  %v317 = vsel %vm316, %v309, %v313
  %v318 = vand.u32 2147483647, %v305
  %vm319 = vcmp.eq.f32.partialorder %v318, 8.507059e+37
  %v320 = vand.u32 %v305, 2147483648
  %v321 = vor.u32 1.1754944e-38, %v320
  %v322 = vsel %vm319, %v321, %v317
  %v323 = vmul.f32 1.0, %v322
  %v324 = vrcp.pop %v306
  %v325 = vmul.f32 %v306, %v324
  %v326 = vsub.f32 1.0, %v325
  %v327 = vmul.f32 %v324, %v326
  %v328 = vadd.f32 %v324, %v327
  %vm329 = vweird.f32 %v306
  %vm330 = vweird.f32 %v324
  %vm331 = vmor %vm329, %vm330
  %v332 = vsel %vm331, %v324, %v328
  %v333 = vand.u32 2147483647, %v306
  %vm334 = vcmp.eq.f32.partialorder %v333, 8.507059e+37
  %v335 = vand.u32 %v306, 2147483648
  %v336 = vor.u32 1.1754944e-38, %v335
  %v337 = vsel %vm334, %v336, %v332
  %v338 = vmul.f32 1.0, %v337
  %v339 = vrcp.pop %v307
  %v340 = vmul.f32 %v307, %v339
  %v341 = vsub.f32 1.0, %v340
  %v342 = vmul.f32 %v339, %v341
  %v343 = vadd.f32 %v339, %v342
  %vm344 = vweird.f32 %v307
  %vm345 = vweird.f32 %v339
  %vm346 = vmor %vm344, %vm345
  %v347 = vsel %vm346, %v339, %v343
  %v348 = vand.u32 2147483647, %v307
  %vm349 = vcmp.eq.f32.partialorder %v348, 8.507059e+37
  %v350 = vand.u32 %v307, 2147483648
  %v351 = vor.u32 1.1754944e-38, %v350
  %v352 = vsel %vm349, %v351, %v347
  %v353 = vmul.f32 1.0, %v352
  %v354 = vrcp.pop %v308
  %v355 = vmul.f32 %v308, %v354
  %v356 = vsub.f32 1.0, %v355
  %v357 = vmul.f32 %v354, %v356
  %v358 = vadd.f32 %v354, %v357
  %vm359 = vweird.f32 %v308
  %vm360 = vweird.f32 %v354
  %vm361 = vmor %vm359, %vm360
  %v362 = vsel %vm361, %v354, %v358
  %v363 = vand.u32 2147483647, %v308
  %vm364 = vcmp.eq.f32.partialorder %v363, 8.507059e+37
  %v365 = vand.u32 %v308, 2147483648
  %v366 = vor.u32 1.1754944e-38, %v365
  %v367 = vsel %vm364, %v366, %v362
  %v368 = vmul.f32 1.0, %v367
  %v369 = vadd.f32 %v184, %v278
  %v370 = vadd.f32 %v187, %v281
  %v371 = vadd.f32 %v190, %v284
  %v372 = vadd.f32 %v193, %v287
  %v373 = vxor.u32 %v369, 2147483648
  %v374 = vxor.u32 %v370, 2147483648
  %v375 = vxor.u32 %v371, 2147483648
  %v376 = vxor.u32 %v372, 2147483648
  %v377 = vmul.f32 %v373, 1.442695
  %v378 = vpow.pop %v377
  %v379 = vmul.f32 %v374, 1.442695
  %v380 = vpow.pop %v379
  %v381 = vmul.f32 %v375, 1.442695
  %v382 = vpow.pop %v381
  %v383 = vmul.f32 %v376, 1.442695
  %v384 = vpow.pop %v383
  %v385 = vadd.f32 %v378, 1.0
  %v386 = vadd.f32 %v380, 1.0
  %v387 = vadd.f32 %v382, 1.0
  %v388 = vadd.f32 %v384, 1.0
  %v389 = vrcp.pop %v385
  %v390 = vmul.f32 %v385, %v389
  %v391 = vsub.f32 1.0, %v390
  %v392 = vmul.f32 %v389, %v391
  %v393 = vadd.f32 %v389, %v392
  %vm394 = vweird.f32 %v385
  %vm395 = vweird.f32 %v389
  %vm396 = vmor %vm394, %vm395
  %v397 = vsel %vm396, %v389, %v393
  %v398 = vand.u32 2147483647, %v385
  %vm399 = vcmp.eq.f32.partialorder %v398, 8.507059e+37
  %v400 = vand.u32 %v385, 2147483648
  %v401 = vor.u32 1.1754944e-38, %v400
  %v402 = vsel %vm399, %v401, %v397
  %v403 = vmul.f32 1.0, %v402
  %v404 = vrcp.pop %v386
  %v405 = vmul.f32 %v386, %v404
  %v406 = vsub.f32 1.0, %v405
  %v407 = vmul.f32 %v404, %v406
  %v408 = vadd.f32 %v404, %v407
  %vm409 = vweird.f32 %v386
  %vm410 = vweird.f32 %v404
  %vm411 = vmor %vm409, %vm410
  %v412 = vsel %vm411, %v404, %v408
  %v413 = vand.u32 2147483647, %v386
  %vm414 = vcmp.eq.f32.partialorder %v413, 8.507059e+37
  %v415 = vand.u32 %v386, 2147483648
  %v416 = vor.u32 1.1754944e-38, %v415
  %v417 = vsel %vm414, %v416, %v412
  %v418 = vmul.f32 1.0, %v417
  %v419 = vrcp.pop %v387
  %v420 = vmul.f32 %v387, %v419
  %v421 = vsub.f32 1.0, %v420
  %v422 = vmul.f32 %v419, %v421
  %v423 = vadd.f32 %v419, %v422
  %vm424 = vweird.f32 %v387
  %vm425 = vweird.f32 %v419
  %vm426 = vmor %vm424, %vm425
  %v427 = vsel %vm426, %v419, %v423
  %v428 = vand.u32 2147483647, %v387
  %vm429 = vcmp.eq.f32.partialorder %v428, 8.507059e+37
  %v430 = vand.u32 %v387, 2147483648
  %v431 = vor.u32 1.1754944e-38, %v430
  %v432 = vsel %vm429, %v431, %v427
  %v433 = vmul.f32 1.0, %v432
  %v434 = vrcp.pop %v388
  %v435 = vmul.f32 %v388, %v434
  %v436 = vsub.f32 1.0, %v435
  %v437 = vmul.f32 %v434, %v436
  %v438 = vadd.f32 %v434, %v437
  %vm439 = vweird.f32 %v388
  %vm440 = vweird.f32 %v434
  %vm441 = vmor %vm439, %vm440
  %v442 = vsel %vm441, %v434, %v438
  %v443 = vand.u32 2147483647, %v388
  %vm444 = vcmp.eq.f32.partialorder %v443, 8.507059e+37
  %v445 = vand.u32 %v388, 2147483648
  %v446 = vor.u32 1.1754944e-38, %v445
  %v447 = vsel %vm444, %v446, %v442
  %v448 = vmul.f32 1.0, %v447
  %v449 = vmul.f32 %v403, %v207
  %v450 = vmul.f32 %v418, %v208
  %v451 = vmul.f32 %v433, %v209
  %v452 = vmul.f32 %v448, %v210
  %v454 = vsel %vm223, %v219, 0
  %v457 = vsel %vm223, %v220, 0
  %v460 = vsel %vm223, %v221, 0
  %v463 = vsel %vm223, %v222, 0
  %465 = vmatpush.msra.mxu0 0.0
  %466 = vmatpush.msra.mxu0 0.0
  %467 = vmatpush.msra.mxu0 0.0
  %468 = vmatpush.msra.mxu0 0.0
  %469 = vmatpush.msra.mxu0 0.0
  %470 = vmatpush.msra.mxu0 0.0
  %471 = vmatpush.msra.mxu0 0.0
  %472 = vmatpush.msra.mxu0 0.0
  %473 = vmatpush.msra.mxu0 0.0
  %474 = vmatpush.msra.mxu0 0.0
  %475 = vmatpush.msra.mxu0 0.0
  %476 = vmatpush.msra.mxu0 0.0
  %477 = vmatpush.msra.mxu0 %v452
  %478 = vmatpush.msra.mxu0 %v451
  %479 = vmatpush.msra.mxu0 %v450
  %480 = vmatpush.msra.mxu0 %v449
  %481 = vmatmul.f32.gmra.mxu0 %v454
  %v482 = vpop.f32.mrf.mxu0
  %v483 = vadd.f32 0.0, %v482
  %484 = vmatmul.f32.gmra.mxu0 %v457
  %v485 = vpop.f32.mrf.mxu0
  %v486 = vadd.f32 0.0, %v485
  %487 = vmatmul.f32.gmra.mxu0 %v460
  %v488 = vpop.f32.mrf.mxu0
  %v489 = vadd.f32 0.0, %v488
  %490 = vmatmul.f32.gmra.mxu0 %v463
  %v491 = vpop.f32.mrf.mxu0
  %v492 = vadd.f32 0.0, %v491
  %493 = vdwg.mxu0
  %v494 = vadd.f32 %v196, %v483
  %v495 = vadd.f32 %v199, %v486
  %v496 = vadd.f32 %v202, %v489
  %v497 = vadd.f32 %v205, %v492
  %v498 = vtanh.pop %v494
  %v499 = vtanh.pop %v495
  %v500 = vtanh.pop %v496
  %v501 = vtanh.pop %v497
  %v502 = vsub.f32 %v207, %v498
  %v503 = vsub.f32 %v208, %v499
  %v504 = vsub.f32 %v209, %v500
  %v505 = vsub.f32 %v210, %v501
  %v506 = vmul.f32 %v323, %v502
  %v507 = vmul.f32 %v338, %v503
  %v508 = vmul.f32 %v353, %v504
  %v509 = vmul.f32 %v368, %v505
  %v510 = vadd.f32 %v498, %v506
  %v511 = vadd.f32 %v499, %v507
  %v512 = vadd.f32 %v500, %v508
  %v513 = vadd.f32 %v501, %v509
  %514 = vst [vmem:[%s8] sm:$0xff] %v510
  %515 = vst [vmem:[%s8 + $0x8] sm:$0xff] %v511
  %516 = vst [vmem:[%s8 + $0x10] sm:$0xff] %v512
  %517 = vst [vmem:[%s8 + $0x18] sm:$0xff] %v513
  %v518 = vld [vmem:[%s6] sm:$0xff]
  %v519 = vld [vmem:[%s6 + $0x8] sm:$0xff]
  %v520 = vld [vmem:[%s6 + $0x10] sm:$0xff]
  %v521 = vld [vmem:[%s7] sm:$0xff]
  %v522 = vld [vmem:[%s7 + $0x8] sm:$0xff]
  %v523 = vld [vmem:[%s7 + $0x10] sm:$0xff]
  %525 = vset.pattern.permute.xlu0 0
  %526 = vperm.xlu0 %525, %v521
  %v527 = vpop.permute.xlu0 %526
  %530 = vset.pattern.permute.xlu0 0
  %531 = vperm.xlu0 %530, %v522
  %v532 = vpop.permute.xlu0 %531
  %535 = vset.pattern.permute.xlu0 0
  %536 = vperm.xlu0 %535, %v523
  %v537 = vpop.permute.xlu0 %536
  %v540 = vsel %vm223, %v518, 0
  %v543 = vsel %vm223, %v519, 0
  %v546 = vsel %vm223, %v520, 0
  %548 = vmatpush.msra.mxu0 0.0
  %549 = vmatpush.msra.mxu0 0.0
  %550 = vmatpush.msra.mxu0 0.0
  %551 = vmatpush.msra.mxu0 0.0
  %552 = vmatpush.msra.mxu0 0.0
  %553 = vmatpush.msra.mxu0 0.0
  %554 = vmatpush.msra.mxu0 0.0
  %555 = vmatpush.msra.mxu0 0.0
  %556 = vmatpush.msra.mxu0 0.0
  %557 = vmatpush.msra.mxu0 0.0
  %558 = vmatpush.msra.mxu0 0.0
  %559 = vmatpush.msra.mxu0 0.0
  %560 = vmatpush.msra.mxu0 %v513
  %561 = vmatpush.msra.mxu0 %v512
  %562 = vmatpush.msra.mxu0 %v511
  %563 = vmatpush.msra.mxu0 %v510
  %564 = vmatmul.f32.gmra.mxu0 %v540
  %v565 = vpop.f32.mrf.mxu0
  %v566 = vadd.f32 %v527, %v565
  %567 = vmatmul.f32.gmra.mxu0 %v543
  %v568 = vpop.f32.mrf.mxu0
  %v569 = vadd.f32 %v532, %v568
  %570 = vmatmul.f32.gmra.mxu0 %v546
  %v571 = vpop.f32.mrf.mxu0
  %v572 = vadd.f32 %v537, %v571
  %573 = vdwg.mxu0
  %574 = vst [vmem:[%s9] sm:$0xff] %v566
  %575 = vst [vmem:[%s9 + $0x8] sm:$0xff] %v569
  %576 = vst [vmem:[%s9 + $0x10] sm:$0xff] %v572
  // Predicated region
  $region34: #{simple_gru_forward.1} parent=0 // pred_check
    _
  $region35: #{simple_gru_forward.1} parent=0 // pred_check_branch
    %578 = sbr.rel (0) target = $region37
  $region36: #{simple_gru_forward.1} parent=0 // pred_region
    _
  $region37: #{simple_gru_forward.1} parent=0 // pred_fallthru
    _
  // Predicated region
  $region38: #{simple_gru_forward.1} parent=0 // pred_check
    _
  $region39: #{simple_gru_forward.1} parent=0 // pred_check_branch
    %580 = sbr.rel (0) target = $region41
  $region40: #{simple_gru_forward.1} parent=0 // pred_region
    _
  $region41: #{simple_gru_forward.1} parent=0 // pred_fallthru
    _
  // Predicated region
  $region42: #{simple_gru_forward.1} parent=0 // pred_check
    _
  $region43: #{simple_gru_forward.1} parent=0 // pred_check_branch
    %582 = sbr.rel (0) target = $region45
  $region44: #{simple_gru_forward.1} parent=0 // pred_region
    _
  $region45: #{simple_gru_forward.1} parent=0 // pred_fallthru
    _
  // Predicated region
  $region46: #{simple_gru_forward.1} parent=0 // pred_check
    _
  $region47: #{simple_gru_forward.1} parent=0 // pred_check_branch
    %584 = sbr.rel (0) target = $region49
  $region48: #{simple_gru_forward.1} parent=0 // pred_region
    _
  $region49: #{simple_gru_forward.1} parent=0 // pred_fallthru
    _

</llo_original>
